<compile_context>
chip_gen: v7x
topology: tpu7x:2x2x1
jax: 0.10.0
libtpu: 0.0.40
codegen_flags: <defaults>
</compile_context>

<pallas_src>
import functools

import jax
import jax.numpy as jnp
from jax.experimental import pallas as pl
from jax.experimental.pallas import tpu as pltpu


def _round_up(x, m):
    return ((x + m - 1) // m) * m


def _vmem_capacity_bytes():
    try:
        return int(pltpu.get_tpu_info().vmem_capacity_bytes)
    except Exception:
        return 64 << 20  # conservative (v7x per-TensorCore)


# --------------------------------------------------------------------------- #
# Kernel 1: fully VMEM-resident, all k iterations in one invocation.
# --------------------------------------------------------------------------- #
def _lp_resident_kernel(*refs, k, alpha, clamp, normalize, reset):
    if reset:
        a_ref, y0_ref, ni_ref, nj_ref, lab_ref, msk_ref, o_ref = refs
    else:
        a_ref, y0_ref, ni_ref, nj_ref, o_ref = refs

    a = a_ref[...]                     # (Np, Np) bf16 raw adjacency
    y0 = y0_ref[...]                   # (Np, Cp) f32 masked labels
    nj = nj_ref[...]                   # (Np, 1)  f32 source-side norm
    a_ni = alpha * ni_ref[...]         # (Np, 1)  f32, alpha folded in
    init = (1.0 - alpha) * y0

    if reset:                          # hoisted out of the k loop
        m = msk_ref[...]
        keep = m * lab_ref[...]
        inv_m = 1.0 - m

    y = y0
    for _ in range(k):                 # k is small & static -> unrolled
        yj = (y * nj).astype(jnp.bfloat16)
        h = jnp.dot(a, yj, preferred_element_type=jnp.float32)   # MXU, f32 acc
        y = init + a_ni * h
        if clamp:
            y = jnp.clip(y, 0.0, 1.0)
        if normalize:
            denom = jnp.maximum(jnp.sum(jnp.abs(y), axis=-1, keepdims=True),
                                1e-12)
            y = y * pl.reciprocal(denom, approx=True)             # EUP slot
        if reset:
            y = keep + inv_m * y
    o_ref[...] = y


# --------------------------------------------------------------------------- #
# Kernel 2: one propagation step, row-tiled over the grid (streaming A).
# --------------------------------------------------------------------------- #
def _lp_step_kernel(*refs, alpha, clamp, normalize, reset):
    if reset:
        a_ref, y_ref, init_ref, ni_ref, nj_ref, lab_ref, msk_ref, o_ref = refs
    else:
        a_ref, y_ref, init_ref, ni_ref, nj_ref, o_ref = refs

    # a_ref : (TM, Np) bf16 slab of raw adjacency
    # y_ref : (Np, Cp) f32 full current labels (VMEM-resident across grid)
    yj = (y_ref[...] * nj_ref[...]).astype(jnp.bfloat16)          # (Np, Cp)
    h = jnp.dot(a_ref[...], yj, preferred_element_type=jnp.float32)  # (TM, Cp)
    y = init_ref[...] + (alpha * ni_ref[...]) * h
    if clamp:
        y = jnp.clip(y, 0.0, 1.0)
    if normalize:
        denom = jnp.maximum(jnp.sum(jnp.abs(y), axis=-1, keepdims=True), 1e-12)
        y = y * pl.reciprocal(denom, approx=True)
    if reset:
        m = msk_ref[...]
        y = m * lab_ref[...] + (1.0 - m) * y
    o_ref[...] = y


# --------------------------------------------------------------------------- #
# Wrapper
# --------------------------------------------------------------------------- #
def label_propagation(adj, labels, mask=None, *, k=5, alpha=0.5,
                      norm_type="sym", clamp=True, normalize=False,
                      reset=False, num_classes=None, force_streaming=False,
                      row_tile=128):
    """adj: (N, N) float, adj[v, u] = #edges u -> v.  labels: (N,) int or (N, C)."""
    N = adj.shape[0]
    adj = adj.astype(jnp.float32)

    # --- glue: one-hot / masking / degree norms (cheap, elementwise) ---
    if labels.ndim > 1 and labels.shape[1] > 1:
        labels_f = labels.astype(jnp.float32)
    else:
        if num_classes is None:
            # TODO(synk): pass num_classes statically to stay jit-traceable.
            num_classes = int(jax.device_get(jnp.max(labels))) + 1
        labels_f = jax.nn.one_hot(labels.reshape(-1), num_classes,
                                  dtype=jnp.float32)
    C = labels_f.shape[1]

    if mask is None:
        mask_f = jnp.ones((N, 1), jnp.float32)
    else:
        mask_f = mask.astype(jnp.float32).reshape(N, 1)
    y0 = labels_f * mask_f

    in_degs = jnp.maximum(adj.sum(axis=1), 1.0)   # edges into v  (row sums)
    out_degs = jnp.maximum(adj.sum(axis=0), 1.0)  # edges out of u (col sums)
    if norm_type == "sym":
        norm_i = in_degs ** -0.5
        norm_j = out_degs ** -0.5
    elif norm_type == "row":
        norm_i = in_degs ** -1.0
        norm_j = jnp.ones_like(out_degs)
    else:
        raise ValueError(f"Expect norm_type to be 'sym' or 'row', got {norm_type}")

    # --- pad to lane/sublane-friendly shapes (zeros are inert) ---
    Np = _round_up(max(N, 8), 128)
    Cp = _round_up(max(C, 1), 128)
    a_pad = jnp.zeros((Np, Np), jnp.bfloat16).at[:N, :N].set(
        adj.astype(jnp.bfloat16))                       # raw 0/1 -> exact in bf16
    y0_pad = jnp.zeros((Np, Cp), jnp.float32).at[:N, :C].set(y0)
    ni_pad = jnp.zeros((Np, 1), jnp.float32).at[:N, 0].set(norm_i)
    nj_pad = jnp.zeros((Np, 1), jnp.float32).at[:N, 0].set(norm_j)
    if reset:
        labels_pad = jnp.zeros((Np, Cp), jnp.float32).at[:N, :C].set(labels_f)
        mask_pad = jnp.zeros((Np, Cp), jnp.float32).at[:N, :C].set(
            jnp.broadcast_to(mask_f, (N, C)))

    cap = _vmem_capacity_bytes()
    budget = int(0.70 * cap)
    yb = Np * Cp * 4
    n_label_like = 2 + (2 if reset else 0)            # y0 + out (+ labels + mask)
    need_resident = Np * Np * 2 + n_label_like * yb + 2 * Np * 4 + 8 * yb
    use_streaming = force_streaming or (need_resident > budget)

    if not use_streaming:
        # ---------------- resident path: single invocation, no pipelining ----
        inputs = [a_pad, y0_pad, ni_pad, nj_pad]
        if reset:
            inputs += [labels_pad, mask_pad]
        vmem_spec = pl.BlockSpec(memory_space=pltpu.MemorySpace.VMEM)
        kernel = functools.partial(
            _lp_resident_kernel, k=int(k), alpha=float(alpha),
            clamp=bool(clamp), normalize=bool(normalize), reset=bool(reset))
        bytes_accessed = Np * Np * 2 + (n_label_like * yb) + 2 * Np * 4
        out_pad = pl.pallas_call(
            kernel,
            out_shape=jax.ShapeDtypeStruct((Np, Cp), jnp.float32),
            in_specs=[vmem_spec] * len(inputs),
            out_specs=vmem_spec,
            compiler_params=pltpu.CompilerParams(
                vmem_limit_bytes=min(need_resident + (16 << 20),
                                     int(0.9 * cap))),
            cost_estimate=pl.CostEstimate(
                flops=2 * int(k) * Np * Np * Cp,
                transcendentals=(int(k) * Np if normalize else 0),
                bytes_accessed=bytes_accessed),
        )(*inputs)
        return out_pad[:N, :C]

    # ---------------- streaming path: row-parallel grid, one call per step ---
    TM = row_tile if (Np % row_tile == 0) else 128
    n_tiles = Np // TM
    init_pad = (1.0 - alpha) * y0_pad

    step_kernel = functools.partial(
        _lp_step_kernel, alpha=float(alpha), clamp=bool(clamp),
        normalize=bool(normalize), reset=bool(reset))

    in_specs = [
        pl.BlockSpec((TM, Np), lambda i: (i, 0)),                # A row slab
        pl.BlockSpec(memory_space=pltpu.MemorySpace.VMEM),       # y (full)
        pl.BlockSpec((TM, Cp), lambda i: (i, 0)),                # init slab
        pl.BlockSpec((TM, 1), lambda i: (i, 0)),                 # norm_i slab
        pl.BlockSpec(memory_space=pltpu.MemorySpace.VMEM),       # norm_j (full)
    ]
    extra = []
    if reset:
        in_specs += [pl.BlockSpec((TM, Cp), lambda i: (i, 0)),
                     pl.BlockSpec((TM, Cp), lambda i: (i, 0))]
        extra = [labels_pad, mask_pad]

    slab_f32 = TM * Cp * 4
    need_step = (2 * TM * Np * 2                       # double-buffered A slab
                 + Np * Cp * 4 + Np * Cp * 2           # y + bf16 scaled copy
                 + 2 * (2 + (2 if reset else 0)) * slab_f32
                 + 2 * TM * 4 + Np * 4
                 + 6 * slab_f32)                       # temporaries slack
    step_call = pl.pallas_call(
        step_kernel,
        out_shape=jax.ShapeDtypeStruct((Np, Cp), jnp.float32),
        grid=(n_tiles,),
        in_specs=in_specs,
        out_specs=pl.BlockSpec((TM, Cp), lambda i: (i, 0)),
        compiler_params=pltpu.CompilerParams(
            dimension_semantics=("parallel",),
            vmem_limit_bytes=min(need_step + (16 << 20), int(0.9 * cap))),
        cost_estimate=pl.CostEstimate(
            flops=2 * Np * Np * Cp,
            transcendentals=(Np if normalize else 0),
            bytes_accessed=Np * Np * 2 + (3 + (2 if reset else 0)) * yb),
    )

    y = y0_pad
    for _ in range(int(k)):
        # TODO(synk): input_output_aliases on y could save one HBM buffer/step.
        y = step_call(a_pad, y, init_pad, ni_pad, nj_pad, *extra)
    return y[:N, :C]


# --------------------------------------------------------------------------- #
# Pure-JAX reference mirroring the PyTorch module (f32).
# --------------------------------------------------------------------------- #
def _reference(adj, labels, mask, *, num_classes, k, alpha, norm_type, clamp,
               normalize, reset):
    N = adj.shape[0]
    adj = adj.astype(jnp.float32)
    labels_f = jax.nn.one_hot(labels.reshape(-1), num_classes, dtype=jnp.float32)
    mask_f = mask.astype(jnp.float32).reshape(N, 1)
    y = labels_f * mask_f
    init = (1.0 - alpha) * y
    in_degs = jnp.maximum(adj.sum(axis=1), 1.0)
    out_degs = jnp.maximum(adj.sum(axis=0), 1.0)
    if norm_type == "sym":
        norm_i = (in_degs ** -0.5)[:, None]
        norm_j = (out_degs ** -0.5)[:, None]
    else:
        norm_i = (in_degs ** -1.0)[:, None]
        norm_j = None
    for _ in range(k):
        h = adj @ (y * norm_j if norm_type == "sym" else y)
        y = init + alpha * h * norm_i
        if clamp:
            y = jnp.clip(y, 0.0, 1.0)
        if normalize:
            y = y / jnp.maximum(jnp.sum(jnp.abs(y), axis=-1, keepdims=True), 1e-12)
        if reset:
            y = mask_f * labels_f + (1.0 - mask_f) * y
    return y


if __name__ == "__main__":
    key = jax.random.PRNGKey(0)

    def make_graph(gkey, n, num_classes, p=0.3):
        k_adj, k_lab, k_msk = jax.random.split(gkey, 3)
        adj = (jax.random.uniform(k_adj, (n, n)) < p).astype(jnp.float32)
        adj = adj * (1.0 - jnp.eye(n, dtype=jnp.float32))   # no self loops
        labels = jax.random.randint(k_lab, (n,), 0, num_classes)
        mask = jax.random.uniform(k_msk, (n,)) < 0.5
        return adj, labels, mask

    tests = [
        # (N, C, cfg, force_streaming)
        (16, 4, dict(k=5, alpha=0.5, norm_type="sym", clamp=True,
                     normalize=False, reset=False), False),
        (200, 6, dict(k=4, alpha=0.6, norm_type="sym", clamp=False,
                      normalize=True, reset=True), True),
        (16, 4, dict(k=3, alpha=0.9, norm_type="row", clamp=True,
                     normalize=False, reset=False), False),
    ]
    keys = jax.random.split(key, len(tests))
    for tkey, (n, c, cfg, stream) in zip(keys, tests):
        adj, labels, mask = make_graph(tkey, n, c)
        out = label_propagation(adj, labels, mask, num_classes=c,
                                force_streaming=stream, **cfg)
        out = jax.block_until_ready(out)
        ref = _reference(adj, labels, mask, num_classes=c, **cfg)
        assert out.shape == ref.shape, (out.shape, ref.shape)
        err = float(jnp.max(jnp.abs(out - ref)))
        assert err < 3e-2, f"mismatch vs reference (N={n}, max err={err})"

    print("KERNEL_OK")
</pallas_src>

<mosaic_0001>
module attributes {stable_mosaic.version = 11 : i64} {
  func.func @_lp_resident_kernel(%arg0: memref<128x128xbf16, #tpu.memory_space<vmem>>, %arg1: memref<128x128xf32, #tpu.memory_space<vmem>>, %arg2: memref<128x1xf32, #tpu.memory_space<vmem>>, %arg3: memref<128x1xf32, #tpu.memory_space<vmem>>, %arg4: memref<128x128xf32, #tpu.memory_space<vmem>>) attributes {dimension_semantics = [], scalar_prefetch = 0 : i64, scratch_operands = 0 : i64, tpu.core_type = #tpu.core_type<tc>} {
    %c0 = arith.constant 0 : index
    %c0_0 = arith.constant 0 : index
    %0 = vector.load %arg0[%c0, %c0_0] : memref<128x128xbf16, #tpu.memory_space<vmem>>, vector<128x128xbf16>
    %c0_1 = arith.constant 0 : index
    %c0_2 = arith.constant 0 : index
    %1 = vector.load %arg1[%c0_1, %c0_2] : memref<128x128xf32, #tpu.memory_space<vmem>>, vector<128x128xf32>
    %c0_3 = arith.constant 0 : index
    %c0_4 = arith.constant 0 : index
    %2 = vector.load %arg3[%c0_3, %c0_4] : memref<128x1xf32, #tpu.memory_space<vmem>>, vector<128x1xf32>
    %c0_5 = arith.constant 0 : index
    %c0_6 = arith.constant 0 : index
    %3 = vector.load %arg2[%c0_5, %c0_6] : memref<128x1xf32, #tpu.memory_space<vmem>>, vector<128x1xf32>
    %cst = arith.constant 5.000000e-01 : f32
    %4 = vector.broadcast %cst : f32 to vector<128x1xf32>
    %5 = arith.mulf %4, %3 : vector<128x1xf32>
    %cst_7 = arith.constant 5.000000e-01 : f32
    %6 = vector.broadcast %cst_7 : f32 to vector<128x128xf32>
    %7 = arith.mulf %6, %1 : vector<128x128xf32>
    %8 = vector.broadcast %2 : vector<128x1xf32> to vector<128x128xf32>
    %9 = arith.mulf %1, %8 : vector<128x128xf32>
    %10 = arith.truncf %9 : vector<128x128xf32> to vector<128x128xbf16>
    %cst_8 = arith.constant dense<0.000000e+00> : vector<128x128xf32>
    %11 = tpu.matmul %0, %10, %cst_8 {dimension_numbers = #tpu.dot_dimension_numbers<[1], [0], [0], [1], [0, 0, 1, 1], [], []>} : vector<128x128xbf16>, vector<128x128xbf16>, vector<128x128xf32> -> vector<128x128xf32>
    %12 = vector.broadcast %5 : vector<128x1xf32> to vector<128x128xf32>
    %13 = arith.mulf %12, %11 : vector<128x128xf32>
    %14 = arith.addf %7, %13 : vector<128x128xf32>
    %cst_9 = arith.constant 0.000000e+00 : f32
    %cst_10 = arith.constant 1.000000e+00 : f32
    %15 = vector.broadcast %cst_9 : f32 to vector<128x128xf32>
    %16 = arith.maximumf %15, %14 : vector<128x128xf32>
    %17 = vector.broadcast %cst_10 : f32 to vector<128x128xf32>
    %18 = arith.minimumf %17, %16 : vector<128x128xf32>
    %19 = vector.broadcast %2 : vector<128x1xf32> to vector<128x128xf32>
    %20 = arith.mulf %18, %19 : vector<128x128xf32>
    %21 = arith.truncf %20 : vector<128x128xf32> to vector<128x128xbf16>
    %cst_11 = arith.constant dense<0.000000e+00> : vector<128x128xf32>
    %22 = tpu.matmul %0, %21, %cst_11 {dimension_numbers = #tpu.dot_dimension_numbers<[1], [0], [0], [1], [0, 0, 1, 1], [], []>} : vector<128x128xbf16>, vector<128x128xbf16>, vector<128x128xf32> -> vector<128x128xf32>
    %23 = vector.broadcast %5 : vector<128x1xf32> to vector<128x128xf32>
    %24 = arith.mulf %23, %22 : vector<128x128xf32>
    %25 = arith.addf %7, %24 : vector<128x128xf32>
    %cst_12 = arith.constant 0.000000e+00 : f32
    %cst_13 = arith.constant 1.000000e+00 : f32
    %26 = vector.broadcast %cst_12 : f32 to vector<128x128xf32>
    %27 = arith.maximumf %26, %25 : vector<128x128xf32>
    %28 = vector.broadcast %cst_13 : f32 to vector<128x128xf32>
    %29 = arith.minimumf %28, %27 : vector<128x128xf32>
    %30 = vector.broadcast %2 : vector<128x1xf32> to vector<128x128xf32>
    %31 = arith.mulf %29, %30 : vector<128x128xf32>
    %32 = arith.truncf %31 : vector<128x128xf32> to vector<128x128xbf16>
    %cst_14 = arith.constant dense<0.000000e+00> : vector<128x128xf32>
    %33 = tpu.matmul %0, %32, %cst_14 {dimension_numbers = #tpu.dot_dimension_numbers<[1], [0], [0], [1], [0, 0, 1, 1], [], []>} : vector<128x128xbf16>, vector<128x128xbf16>, vector<128x128xf32> -> vector<128x128xf32>
    %34 = vector.broadcast %5 : vector<128x1xf32> to vector<128x128xf32>
    %35 = arith.mulf %34, %33 : vector<128x128xf32>
    %36 = arith.addf %7, %35 : vector<128x128xf32>
    %cst_15 = arith.constant 0.000000e+00 : f32
    %cst_16 = arith.constant 1.000000e+00 : f32
    %37 = vector.broadcast %cst_15 : f32 to vector<128x128xf32>
    %38 = arith.maximumf %37, %36 : vector<128x128xf32>
    %39 = vector.broadcast %cst_16 : f32 to vector<128x128xf32>
    %40 = arith.minimumf %39, %38 : vector<128x128xf32>
    %41 = vector.broadcast %2 : vector<128x1xf32> to vector<128x128xf32>
    %42 = arith.mulf %40, %41 : vector<128x128xf32>
    %43 = arith.truncf %42 : vector<128x128xf32> to vector<128x128xbf16>
    %cst_17 = arith.constant dense<0.000000e+00> : vector<128x128xf32>
    %44 = tpu.matmul %0, %43, %cst_17 {dimension_numbers = #tpu.dot_dimension_numbers<[1], [0], [0], [1], [0, 0, 1, 1], [], []>} : vector<128x128xbf16>, vector<128x128xbf16>, vector<128x128xf32> -> vector<128x128xf32>
    %45 = vector.broadcast %5 : vector<128x1xf32> to vector<128x128xf32>
    %46 = arith.mulf %45, %44 : vector<128x128xf32>
    %47 = arith.addf %7, %46 : vector<128x128xf32>
    %cst_18 = arith.constant 0.000000e+00 : f32
    %cst_19 = arith.constant 1.000000e+00 : f32
    %48 = vector.broadcast %cst_18 : f32 to vector<128x128xf32>
    %49 = arith.maximumf %48, %47 : vector<128x128xf32>
    %50 = vector.broadcast %cst_19 : f32 to vector<128x128xf32>
    %51 = arith.minimumf %50, %49 : vector<128x128xf32>
    %52 = vector.broadcast %2 : vector<128x1xf32> to vector<128x128xf32>
    %53 = arith.mulf %51, %52 : vector<128x128xf32>
    %54 = arith.truncf %53 : vector<128x128xf32> to vector<128x128xbf16>
    %cst_20 = arith.constant dense<0.000000e+00> : vector<128x128xf32>
    %55 = tpu.matmul %0, %54, %cst_20 {dimension_numbers = #tpu.dot_dimension_numbers<[1], [0], [0], [1], [0, 0, 1, 1], [], []>} : vector<128x128xbf16>, vector<128x128xbf16>, vector<128x128xf32> -> vector<128x128xf32>
    %56 = vector.broadcast %5 : vector<128x1xf32> to vector<128x128xf32>
    %57 = arith.mulf %56, %55 : vector<128x128xf32>
    %58 = arith.addf %7, %57 : vector<128x128xf32>
    %cst_21 = arith.constant 0.000000e+00 : f32
    %cst_22 = arith.constant 1.000000e+00 : f32
    %59 = vector.broadcast %cst_21 : f32 to vector<128x128xf32>
    %60 = arith.maximumf %59, %58 : vector<128x128xf32>
    %61 = vector.broadcast %cst_22 : f32 to vector<128x128xf32>
    %62 = arith.minimumf %61, %60 : vector<128x128xf32>
    %c0_23 = arith.constant 0 : index
    %c0_24 = arith.constant 0 : index
    %63 = vector.load %arg4[%c0_23, %c0_24] : memref<128x128xf32, #tpu.memory_space<vmem>>, vector<128x128xf32>
    tpu.vector_store %arg4[%c0_23, %c0_24], %62 {strides = array<i32>} : memref<128x128xf32, #tpu.memory_space<vmem>>, vector<128x128xf32>,
    return
  }
}

</mosaic_0001>

<llo_original>
// kernel: tpu_custom_call.1
$region0: #{tpu_custom_call.1}
  #allocation0 [shape = 'u32[]', space=smem, size = 0x4, offset = 0x4, fixed_abs, tag = 'smem constant byte address 0x4 - core index']
  #allocation1 [shape = 'u32[144,128]{1,0:T(1,128)}', space=vmem, size = 0x12000, scoped, tag = 'internal scratch']
  %s0 = inlined_call_operand.vmem [shape: bf16[128,128], index: 0, kind: input, shape index: {}]
  %s1 = inlined_call_operand.vmem [shape: f32[128,128], index: 1, kind: input, shape index: {}]
  %s2 = inlined_call_operand.vmem [shape: f32[128,1], index: 2, kind: input, shape index: {}]
  %s3 = inlined_call_operand.vmem [shape: f32[128,1], index: 3, kind: input, shape index: {}]
  %s4 = inlined_call_operand.hbm [shape: f32[128,128], index: 4, kind: output, shape index: {}]
  %s5 = sld [smem:[#allocation0]]
  $region26: #{tpu_custom_call.1} parent=0
    _
  %s7 = ssub.s32 1, %s5
  %s8 = scalar_select 0, %s7, %s5
  $region1: #{tpu_custom_call.1} parent=0
    #allocation2 [shape = 'u8[65536]{0}', space=vmem, size = 0x10000, scoped, tag = 'output window, operand 0, single buffered']
    #allocation3 [shape = 's32[1]{0}', space=sflag, size = 0x4, scoped, tag = 'scoped memory for tpu_custom_call.1']
    %9 = vsyncpa [#allocation3], 0
    // Predicated region
    $region2: #{tpu_custom_call.1} parent=1 // pred_check
      _
    $region3: #{tpu_custom_call.1} parent=1 // pred_check_branch
      %11 = sbr.rel (0) target = $region5
    $region4: #{tpu_custom_call.1} parent=1 // pred_region
      _
    $region5: #{tpu_custom_call.1} parent=1 // pred_fallthru
      _
    // Predicated region
    $region6: #{tpu_custom_call.1} parent=1 // pred_check
      _
    $region7: #{tpu_custom_call.1} parent=1 // pred_check_branch
      %13 = sbr.rel (0) target = $region9
    $region8: #{tpu_custom_call.1} parent=1 // pred_region
      _
    $region9: #{tpu_custom_call.1} parent=1 // pred_fallthru
      _
    // Predicated region
    $region10: #{tpu_custom_call.1} parent=1 // pred_check
      _
    $region11: #{tpu_custom_call.1} parent=1 // pred_check_branch
      %15 = sbr.rel (0) target = $region13
    $region12: #{tpu_custom_call.1} parent=1 // pred_region
      _
    $region13: #{tpu_custom_call.1} parent=1 // pred_fallthru
      _
    // Predicated region
    $region14: #{tpu_custom_call.1} parent=1 // pred_check
      _
    $region15: #{tpu_custom_call.1} parent=1 // pred_check_branch
      %17 = sbr.rel (0) target = $region17
    $region16: #{tpu_custom_call.1} parent=1 // pred_region
      _
    $region17: #{tpu_custom_call.1} parent=1 // pred_fallthru
      _
    %v19 = vld [vmem:[%s0] sm:$0xf]
    %v20 = vld [vmem:[%s0 + $0x4] sm:$0xf]
    %v21 = vld [vmem:[%s0 + $0x8] sm:$0xf]
    %v22 = vld [vmem:[%s0 + $0xc] sm:$0xf]
    %v23 = vld [vmem:[%s0 + $0x10] sm:$0xf]
    %v24 = vld [vmem:[%s0 + $0x14] sm:$0xf]
    %v25 = vld [vmem:[%s0 + $0x18] sm:$0xf]
    %v26 = vld [vmem:[%s0 + $0x1c] sm:$0xf]
    %v27 = vld [vmem:[%s0 + $0x20] sm:$0xf]
    %v28 = vld [vmem:[%s0 + $0x24] sm:$0xf]
    %v29 = vld [vmem:[%s0 + $0x28] sm:$0xf]
    %v30 = vld [vmem:[%s0 + $0x2c] sm:$0xf]
    %v31 = vld [vmem:[%s0 + $0x30] sm:$0xf]
    %v32 = vld [vmem:[%s0 + $0x34] sm:$0xf]
    %v33 = vld [vmem:[%s0 + $0x38] sm:$0xf]
    %v34 = vld [vmem:[%s0 + $0x3c] sm:$0xf]
    %v35 = vld [vmem:[%s1] sm:$0xff]
    %v36 = vld [vmem:[%s1 + $0x8] sm:$0xff]
    %v37 = vld [vmem:[%s1 + $0x10] sm:$0xff]
    %v38 = vld [vmem:[%s1 + $0x18] sm:$0xff]
    %v39 = vld [vmem:[%s1 + $0x20] sm:$0xff]
    %v40 = vld [vmem:[%s1 + $0x28] sm:$0xff]
    %v41 = vld [vmem:[%s1 + $0x30] sm:$0xff]
    %v42 = vld [vmem:[%s1 + $0x38] sm:$0xff]
    %v43 = vld [vmem:[%s1 + $0x40] sm:$0xff]
    %v44 = vld [vmem:[%s1 + $0x48] sm:$0xff]
    %v45 = vld [vmem:[%s1 + $0x50] sm:$0xff]
    %v46 = vld [vmem:[%s1 + $0x58] sm:$0xff]
    %v47 = vld [vmem:[%s1 + $0x60] sm:$0xff]
    %v48 = vld [vmem:[%s1 + $0x68] sm:$0xff]
    %v49 = vld [vmem:[%s1 + $0x70] sm:$0xff]
    %v50 = vld [vmem:[%s1 + $0x78] sm:$0xff]
    %v51 = vld [vmem:[%s3] sm:$0xff]
    %v52 = vld [vmem:[%s3 + $0x8] sm:$0xff]
    %v53 = vld [vmem:[%s3 + $0x10] sm:$0xff]
    %v54 = vld [vmem:[%s3 + $0x18] sm:$0xff]
    %v55 = vld [vmem:[%s3 + $0x20] sm:$0xff]
    %v56 = vld [vmem:[%s3 + $0x28] sm:$0xff]
    %v57 = vld [vmem:[%s3 + $0x30] sm:$0xff]
    %v58 = vld [vmem:[%s3 + $0x38] sm:$0xff]
    %v59 = vld [vmem:[%s3 + $0x40] sm:$0xff]
    %v60 = vld [vmem:[%s3 + $0x48] sm:$0xff]
    %v61 = vld [vmem:[%s3 + $0x50] sm:$0xff]
    %v62 = vld [vmem:[%s3 + $0x58] sm:$0xff]
    %v63 = vld [vmem:[%s3 + $0x60] sm:$0xff]
    %v64 = vld [vmem:[%s3 + $0x68] sm:$0xff]
    %v65 = vld [vmem:[%s3 + $0x70] sm:$0xff]
    %v66 = vld [vmem:[%s3 + $0x78] sm:$0xff]
    %v67 = vld [vmem:[%s2] sm:$0xff]
    %v68 = vld [vmem:[%s2 + $0x8] sm:$0xff]
    %v69 = vld [vmem:[%s2 + $0x10] sm:$0xff]
    %v70 = vld [vmem:[%s2 + $0x18] sm:$0xff]
    %v71 = vld [vmem:[%s2 + $0x20] sm:$0xff]
    %v72 = vld [vmem:[%s2 + $0x28] sm:$0xff]
    %v73 = vld [vmem:[%s2 + $0x30] sm:$0xff]
    %v74 = vld [vmem:[%s2 + $0x38] sm:$0xff]
    %v75 = vld [vmem:[%s2 + $0x40] sm:$0xff]
    %v76 = vld [vmem:[%s2 + $0x48] sm:$0xff]
    %v77 = vld [vmem:[%s2 + $0x50] sm:$0xff]
    %v78 = vld [vmem:[%s2 + $0x58] sm:$0xff]
    %v79 = vld [vmem:[%s2 + $0x60] sm:$0xff]
    %v80 = vld [vmem:[%s2 + $0x68] sm:$0xff]
    %v81 = vld [vmem:[%s2 + $0x70] sm:$0xff]
    %v82 = vld [vmem:[%s2 + $0x78] sm:$0xff]
    %v83 = vmul.f32 %v67, 0.5
    %v84 = vmul.f32 %v68, 0.5
    %v85 = vmul.f32 %v69, 0.5
    %v86 = vmul.f32 %v70, 0.5
    %v87 = vmul.f32 %v71, 0.5
    %v88 = vmul.f32 %v72, 0.5
    %v89 = vmul.f32 %v73, 0.5
    %v90 = vmul.f32 %v74, 0.5
    %v91 = vmul.f32 %v75, 0.5
    %v92 = vmul.f32 %v76, 0.5
    %v93 = vmul.f32 %v77, 0.5
    %v94 = vmul.f32 %v78, 0.5
    %v95 = vmul.f32 %v79, 0.5
    %v96 = vmul.f32 %v80, 0.5
    %v97 = vmul.f32 %v81, 0.5
    %v98 = vmul.f32 %v82, 0.5
    %v99 = vmul.f32 %v35, 0.5
    %v100 = vmul.f32 %v36, 0.5
    %v101 = vmul.f32 %v37, 0.5
    %v102 = vmul.f32 %v38, 0.5
    %v103 = vmul.f32 %v39, 0.5
    %v104 = vmul.f32 %v40, 0.5
    %v105 = vmul.f32 %v41, 0.5
    %v106 = vmul.f32 %v42, 0.5
    %v107 = vmul.f32 %v43, 0.5
    %v108 = vmul.f32 %v44, 0.5
    %v109 = vmul.f32 %v45, 0.5
    %v110 = vmul.f32 %v46, 0.5
    %v111 = vmul.f32 %v47, 0.5
    %v112 = vmul.f32 %v48, 0.5
    %v113 = vmul.f32 %v49, 0.5
    %v114 = vmul.f32 %v50, 0.5
    %116 = vset.pattern.permute.xlu0 0
    %117 = vperm.xlu0 %116, %v51
    %v118 = vpop.permute.xlu0 %117
    %121 = vset.pattern.permute.xlu0 0
    %122 = vperm.xlu0 %121, %v52
    %v123 = vpop.permute.xlu0 %122
    %126 = vset.pattern.permute.xlu0 0
    %127 = vperm.xlu0 %126, %v53
    %v128 = vpop.permute.xlu0 %127
    %131 = vset.pattern.permute.xlu0 0
    %132 = vperm.xlu0 %131, %v54
    %v133 = vpop.permute.xlu0 %132
    %136 = vset.pattern.permute.xlu0 0
    %137 = vperm.xlu0 %136, %v55
    %v138 = vpop.permute.xlu0 %137
    %141 = vset.pattern.permute.xlu0 0
    %142 = vperm.xlu0 %141, %v56
    %v143 = vpop.permute.xlu0 %142
    %146 = vset.pattern.permute.xlu0 0
    %147 = vperm.xlu0 %146, %v57
    %v148 = vpop.permute.xlu0 %147
    %151 = vset.pattern.permute.xlu0 0
    %152 = vperm.xlu0 %151, %v58
    %v153 = vpop.permute.xlu0 %152
    %156 = vset.pattern.permute.xlu0 0
    %157 = vperm.xlu0 %156, %v59
    %v158 = vpop.permute.xlu0 %157
    %161 = vset.pattern.permute.xlu0 0
    %162 = vperm.xlu0 %161, %v60
    %v163 = vpop.permute.xlu0 %162
    %166 = vset.pattern.permute.xlu0 0
    %167 = vperm.xlu0 %166, %v61
    %v168 = vpop.permute.xlu0 %167
    %171 = vset.pattern.permute.xlu0 0
    %172 = vperm.xlu0 %171, %v62
    %v173 = vpop.permute.xlu0 %172
    %176 = vset.pattern.permute.xlu0 0
    %177 = vperm.xlu0 %176, %v63
    %v178 = vpop.permute.xlu0 %177
    %181 = vset.pattern.permute.xlu0 0
    %182 = vperm.xlu0 %181, %v64
    %v183 = vpop.permute.xlu0 %182
    %186 = vset.pattern.permute.xlu0 0
    %187 = vperm.xlu0 %186, %v65
    %v188 = vpop.permute.xlu0 %187
    %191 = vset.pattern.permute.xlu0 0
    %192 = vperm.xlu0 %191, %v66
    %v193 = vpop.permute.xlu0 %192
    %v195 = vmul.f32 %v35, %v118
    %v196 = vmul.f32 %v36, %v123
    %v197 = vmul.f32 %v37, %v128
    %v198 = vmul.f32 %v38, %v133
    %v199 = vmul.f32 %v39, %v138
    %v200 = vmul.f32 %v40, %v143
    %v201 = vmul.f32 %v41, %v148
    %v202 = vmul.f32 %v42, %v153
    %v203 = vmul.f32 %v43, %v158
    %v204 = vmul.f32 %v44, %v163
    %v205 = vmul.f32 %v45, %v168
    %v206 = vmul.f32 %v46, %v173
    %v207 = vmul.f32 %v47, %v178
    %v208 = vmul.f32 %v48, %v183
    %v209 = vmul.f32 %v49, %v188
    %v210 = vmul.f32 %v50, %v193
    %v211 = vpack.c.bf16 %v196, %v195
    %v212 = vpack.c.bf16 %v198, %v197
    %v213 = vpack.c.bf16 %v200, %v199
    %v214 = vpack.c.bf16 %v202, %v201
    %v215 = vpack.c.bf16 %v204, %v203
    %v216 = vpack.c.bf16 %v206, %v205
    %v217 = vpack.c.bf16 %v208, %v207
    %v218 = vpack.c.bf16 %v210, %v209
    %v235 = vunpack.c.l.b16 %v19
    %v236 = vunpack.c.l.b16 %v20
    %v237 = vunpack.c.l.b16 %v21
    %v238 = vunpack.c.l.b16 %v22
    %v239 = vunpack.c.l.b16 %v23
    %v240 = vunpack.c.l.b16 %v24
    %v241 = vunpack.c.l.b16 %v25
    %v242 = vunpack.c.l.b16 %v26
    %v243 = vunpack.c.l.b16 %v27
    %v244 = vunpack.c.l.b16 %v28
    %v245 = vunpack.c.l.b16 %v29
    %v246 = vunpack.c.l.b16 %v30
    %v247 = vunpack.c.l.b16 %v31
    %v248 = vunpack.c.l.b16 %v32
    %v249 = vunpack.c.l.b16 %v33
    %v250 = vunpack.c.l.b16 %v34
    %v251 = vpack.c.b16 %v236, %v235
    %v252 = vpack.c.b16 %v238, %v237
    %v253 = vpack.c.b16 %v240, %v239
    %v254 = vpack.c.b16 %v242, %v241
    %v255 = vpack.c.b16 %v244, %v243
    %v256 = vpack.c.b16 %v246, %v245
    %v257 = vpack.c.b16 %v248, %v247
    %v258 = vpack.c.b16 %v250, %v249
    %267 = vmatprep.subr.bf16.mxu0 0
    %268 = vmatpush1.bf16.msra.mxu0 %v211
    %269 = vmatprep.subr.bf16.mxu0 0
    %270 = vmatpush1.bf16.msra.mxu0 %v212
    %271 = vmatprep.subr.bf16.mxu0 0
    %272 = vmatpush1.bf16.msra.mxu0 %v213
    %273 = vmatprep.subr.bf16.mxu0 0
    %274 = vmatpush1.bf16.msra.mxu0 %v214
    %275 = vmatprep.subr.bf16.mxu0 0
    %276 = vmatpush1.bf16.msra.mxu0 %v215
    %277 = vmatprep.subr.bf16.mxu0 0
    %278 = vmatpush1.bf16.msra.mxu0 %v216
    %279 = vmatprep.subr.bf16.mxu0 0
    %280 = vmatpush1.bf16.msra.mxu0 %v217
    %281 = vmatprep.subr.bf16.mxu0 0
    %282 = vmatpush1.bf16.msra.mxu0 %v218
    %283 = vmatprep.subr.bf16.mxu0 0
    %284 = vmatpush1.bf16.msra.mxu0 0
    %285 = vmatprep.subr.bf16.mxu0 0
    %286 = vmatpush1.bf16.msra.mxu0 0
    %287 = vmatprep.subr.bf16.mxu0 0
    %288 = vmatpush1.bf16.msra.mxu0 0
    %289 = vmatprep.subr.bf16.mxu0 0
    %290 = vmatpush1.bf16.msra.mxu0 0
    %291 = vmatprep.subr.bf16.mxu0 0
    %292 = vmatpush1.bf16.msra.mxu0 0
    %293 = vmatprep.subr.bf16.mxu0 0
    %294 = vmatpush1.bf16.msra.mxu0 0
    %295 = vmatprep.subr.bf16.mxu0 0
    %296 = vmatpush1.bf16.msra.mxu0 0
    %297 = vmatprep.subr.bf16.mxu0 0
    %298 = vmatpush1.bf16.msra.mxu0 0
    %299 = vmatprep.mubr.bf16.mxu0 0
    %300 = vmatmul.mubr.bf16.gmra.mrb[0].mxu0 %v251
    %v301 = vpop.f32.mrb[0].mxu0
    %v302 = vadd.f32 0.0, %v301
    %v303 = vpop.f32.mrb[0].mxu0
    %v304 = vpop.f32.mrb[0].mxu0
    %v305 = vadd.f32 0.0, %v304
    %v306 = vpop.f32.mrb[0].mxu0
    %307 = vmatprep.mubr.bf16.mxu0 0
    %308 = vmatmul.mubr.bf16.gmra.mrb[0].mxu0 %v252
    %v309 = vpop.f32.mrb[0].mxu0
    %v310 = vadd.f32 0.0, %v309
    %v311 = vpop.f32.mrb[0].mxu0
    %v312 = vpop.f32.mrb[0].mxu0
    %v313 = vadd.f32 0.0, %v312
    %v314 = vpop.f32.mrb[0].mxu0
    %315 = vmatprep.mubr.bf16.mxu0 0
    %316 = vmatmul.mubr.bf16.gmra.mrb[0].mxu0 %v253
    %v317 = vpop.f32.mrb[0].mxu0
    %v318 = vadd.f32 0.0, %v317
    %v319 = vpop.f32.mrb[0].mxu0
    %v320 = vpop.f32.mrb[0].mxu0
    %v321 = vadd.f32 0.0, %v320
    %v322 = vpop.f32.mrb[0].mxu0
    %323 = vmatprep.mubr.bf16.mxu0 0
    %324 = vmatmul.mubr.bf16.gmra.mrb[0].mxu0 %v254
    %v325 = vpop.f32.mrb[0].mxu0
    %v326 = vadd.f32 0.0, %v325
    %v327 = vpop.f32.mrb[0].mxu0
    %v328 = vpop.f32.mrb[0].mxu0
    %v329 = vadd.f32 0.0, %v328
    %v330 = vpop.f32.mrb[0].mxu0
    %331 = vmatprep.mubr.bf16.mxu0 0
    %332 = vmatmul.mubr.bf16.gmra.mrb[0].mxu0 %v255
    %v333 = vpop.f32.mrb[0].mxu0
    %v334 = vadd.f32 0.0, %v333
    %v335 = vpop.f32.mrb[0].mxu0
    %v336 = vpop.f32.mrb[0].mxu0
    %v337 = vadd.f32 0.0, %v336
    %v338 = vpop.f32.mrb[0].mxu0
    %339 = vmatprep.mubr.bf16.mxu0 0
    %340 = vmatmul.mubr.bf16.gmra.mrb[0].mxu0 %v256
    %v341 = vpop.f32.mrb[0].mxu0
    %v342 = vadd.f32 0.0, %v341
    %v343 = vpop.f32.mrb[0].mxu0
    %v344 = vpop.f32.mrb[0].mxu0
    %v345 = vadd.f32 0.0, %v344
    %v346 = vpop.f32.mrb[0].mxu0
    %347 = vmatprep.mubr.bf16.mxu0 0
    %348 = vmatmul.mubr.bf16.gmra.mrb[0].mxu0 %v257
    %v349 = vpop.f32.mrb[0].mxu0
    %v350 = vadd.f32 0.0, %v349
    %v351 = vpop.f32.mrb[0].mxu0
    %v352 = vpop.f32.mrb[0].mxu0
    %v353 = vadd.f32 0.0, %v352
    %v354 = vpop.f32.mrb[0].mxu0
    %355 = vmatprep.mubr.bf16.mxu0 0
    %356 = vmatmul.mubr.bf16.gmra.mrb[0].mxu0 %v258
    %v357 = vpop.f32.mrb[0].mxu0
    %v358 = vadd.f32 0.0, %v357
    %v359 = vpop.f32.mrb[0].mxu0
    %v360 = vpop.f32.mrb[0].mxu0
    %v361 = vadd.f32 0.0, %v360
    %v362 = vpop.f32.mrb[0].mxu0
    %363 = vdwg.mxu0
    %365 = vset.pattern.permute.xlu0 0
    %366 = vperm.xlu0 %365, %v83
    %v367 = vpop.permute.xlu0 %366
    %370 = vset.pattern.permute.xlu0 0
    %371 = vperm.xlu0 %370, %v84
    %v372 = vpop.permute.xlu0 %371
    %375 = vset.pattern.permute.xlu0 0
    %376 = vperm.xlu0 %375, %v85
    %v377 = vpop.permute.xlu0 %376
    %380 = vset.pattern.permute.xlu0 0
    %381 = vperm.xlu0 %380, %v86
    %v382 = vpop.permute.xlu0 %381
    %385 = vset.pattern.permute.xlu0 0
    %386 = vperm.xlu0 %385, %v87
    %v387 = vpop.permute.xlu0 %386
    %390 = vset.pattern.permute.xlu0 0
    %391 = vperm.xlu0 %390, %v88
    %v392 = vpop.permute.xlu0 %391
    %395 = vset.pattern.permute.xlu0 0
    %396 = vperm.xlu0 %395, %v89
    %v397 = vpop.permute.xlu0 %396
    %400 = vset.pattern.permute.xlu0 0
    %401 = vperm.xlu0 %400, %v90
    %v402 = vpop.permute.xlu0 %401
    %405 = vset.pattern.permute.xlu0 0
    %406 = vperm.xlu0 %405, %v91
    %v407 = vpop.permute.xlu0 %406
    %410 = vset.pattern.permute.xlu0 0
    %411 = vperm.xlu0 %410, %v92
    %v412 = vpop.permute.xlu0 %411
    %415 = vset.pattern.permute.xlu0 0
    %416 = vperm.xlu0 %415, %v93
    %v417 = vpop.permute.xlu0 %416
    %420 = vset.pattern.permute.xlu0 0
    %421 = vperm.xlu0 %420, %v94
    %v422 = vpop.permute.xlu0 %421
    %425 = vset.pattern.permute.xlu0 0
    %426 = vperm.xlu0 %425, %v95
    %v427 = vpop.permute.xlu0 %426
    %430 = vset.pattern.permute.xlu0 0
    %431 = vperm.xlu0 %430, %v96
    %v432 = vpop.permute.xlu0 %431
    %435 = vset.pattern.permute.xlu0 0
    %436 = vperm.xlu0 %435, %v97
    %v437 = vpop.permute.xlu0 %436
    %440 = vset.pattern.permute.xlu0 0
    %441 = vperm.xlu0 %440, %v98
    %v442 = vpop.permute.xlu0 %441
    %v444 = vmul.f32 %v367, %v302
    %v445 = vmul.f32 %v372, %v305
    %v446 = vmul.f32 %v377, %v310
    %v447 = vmul.f32 %v382, %v313
    %v448 = vmul.f32 %v387, %v318
    %v449 = vmul.f32 %v392, %v321
    %v450 = vmul.f32 %v397, %v326
    %v451 = vmul.f32 %v402, %v329
    %v452 = vmul.f32 %v407, %v334
    %v453 = vmul.f32 %v412, %v337
    %v454 = vmul.f32 %v417, %v342
    %v455 = vmul.f32 %v422, %v345
    %v456 = vmul.f32 %v427, %v350
    %v457 = vmul.f32 %v432, %v353
    %v458 = vmul.f32 %v437, %v358
    %v459 = vmul.f32 %v442, %v361
    %v460 = vadd.f32 %v99, %v444
    %v461 = vadd.f32 %v100, %v445
    %v462 = vadd.f32 %v101, %v446
    %v463 = vadd.f32 %v102, %v447
    %v464 = vadd.f32 %v103, %v448
    %v465 = vadd.f32 %v104, %v449
    %v466 = vadd.f32 %v105, %v450
    %v467 = vadd.f32 %v106, %v451
    %v468 = vadd.f32 %v107, %v452
    %v469 = vadd.f32 %v108, %v453
    %v470 = vadd.f32 %v109, %v454
    %v471 = vadd.f32 %v110, %v455
    %v472 = vadd.f32 %v111, %v456
    %v473 = vadd.f32 %v112, %v457
    %v474 = vadd.f32 %v113, %v458
    %v475 = vadd.f32 %v114, %v459
    %v476 = vmax.f32 %v460, 0.0
    %v477 = vmax.f32 %v461, 0.0
    %v478 = vmax.f32 %v462, 0.0
    %v479 = vmax.f32 %v463, 0.0
    %v480 = vmax.f32 %v464, 0.0
    %v481 = vmax.f32 %v465, 0.0
    %v482 = vmax.f32 %v466, 0.0
    %v483 = vmax.f32 %v467, 0.0
    %v484 = vmax.f32 %v468, 0.0
    %v485 = vmax.f32 %v469, 0.0
    %v486 = vmax.f32 %v470, 0.0
    %v487 = vmax.f32 %v471, 0.0
    %v488 = vmax.f32 %v472, 0.0
    %v489 = vmax.f32 %v473, 0.0
    %v490 = vmax.f32 %v474, 0.0
    %v491 = vmax.f32 %v475, 0.0
    %v492 = vmin.f32 %v476, 1.0
    %v493 = vmin.f32 %v477, 1.0
    %v494 = vmin.f32 %v478, 1.0
    %v495 = vmin.f32 %v479, 1.0
    %v496 = vmin.f32 %v480, 1.0
    %v497 = vmin.f32 %v481, 1.0
    %v498 = vmin.f32 %v482, 1.0
    %v499 = vmin.f32 %v483, 1.0
    %v500 = vmin.f32 %v484, 1.0
    %v501 = vmin.f32 %v485, 1.0
    %v502 = vmin.f32 %v486, 1.0
    %v503 = vmin.f32 %v487, 1.0
    %v504 = vmin.f32 %v488, 1.0
    %v505 = vmin.f32 %v489, 1.0
    %v506 = vmin.f32 %v490, 1.0
    %v507 = vmin.f32 %v491, 1.0
    %v508 = vmul.f32 %v492, %v118
    %v509 = vmul.f32 %v493, %v123
    %v510 = vmul.f32 %v494, %v128
    %v511 = vmul.f32 %v495, %v133
    %v512 = vmul.f32 %v496, %v138
    %v513 = vmul.f32 %v497, %v143
    %v514 = vmul.f32 %v498, %v148
    %v515 = vmul.f32 %v499, %v153
    %v516 = vmul.f32 %v500, %v158
    %v517 = vmul.f32 %v501, %v163
    %v518 = vmul.f32 %v502, %v168
    %v519 = vmul.f32 %v503, %v173
    %v520 = vmul.f32 %v504, %v178
    %v521 = vmul.f32 %v505, %v183
    %v522 = vmul.f32 %v506, %v188
    %v523 = vmul.f32 %v507, %v193
    %v524 = vpack.c.bf16 %v509, %v508
    %v525 = vpack.c.bf16 %v511, %v510
    %v526 = vpack.c.bf16 %v513, %v512
    %v527 = vpack.c.bf16 %v515, %v514
    %v528 = vpack.c.bf16 %v517, %v516
    %v529 = vpack.c.bf16 %v519, %v518
    %v530 = vpack.c.bf16 %v521, %v520
    %v531 = vpack.c.bf16 %v523, %v522
    %532 = vmatprep.subr.bf16.mxu0 0
    %533 = vmatpush1.bf16.msra.mxu0 %v524
    %534 = vmatprep.subr.bf16.mxu0 0
    %535 = vmatpush1.bf16.msra.mxu0 %v525
    %536 = vmatprep.subr.bf16.mxu0 0
    %537 = vmatpush1.bf16.msra.mxu0 %v526
    %538 = vmatprep.subr.bf16.mxu0 0
    %539 = vmatpush1.bf16.msra.mxu0 %v527
    %540 = vmatprep.subr.bf16.mxu0 0
    %541 = vmatpush1.bf16.msra.mxu0 %v528
    %542 = vmatprep.subr.bf16.mxu0 0
    %543 = vmatpush1.bf16.msra.mxu0 %v529
    %544 = vmatprep.subr.bf16.mxu0 0
    %545 = vmatpush1.bf16.msra.mxu0 %v530
    %546 = vmatprep.subr.bf16.mxu0 0
    %547 = vmatpush1.bf16.msra.mxu0 %v531
    %548 = vmatprep.subr.bf16.mxu0 0
    %549 = vmatpush1.bf16.msra.mxu0 0
    %550 = vmatprep.subr.bf16.mxu0 0
    %551 = vmatpush1.bf16.msra.mxu0 0
    %552 = vmatprep.subr.bf16.mxu0 0
    %553 = vmatpush1.bf16.msra.mxu0 0
    %554 = vmatprep.subr.bf16.mxu0 0
    %555 = vmatpush1.bf16.msra.mxu0 0
    %556 = vmatprep.subr.bf16.mxu0 0
    %557 = vmatpush1.bf16.msra.mxu0 0
    %558 = vmatprep.subr.bf16.mxu0 0
    %559 = vmatpush1.bf16.msra.mxu0 0
    %560 = vmatprep.subr.bf16.mxu0 0
    %561 = vmatpush1.bf16.msra.mxu0 0
    %562 = vmatprep.subr.bf16.mxu0 0
    %563 = vmatpush1.bf16.msra.mxu0 0
    %564 = vmatprep.mubr.bf16.mxu0 0
    %565 = vmatmul.mubr.bf16.gmra.mrb[0].mxu0 %v251
    %v566 = vpop.f32.mrb[0].mxu0
    %v567 = vadd.f32 0.0, %v566
    %v568 = vpop.f32.mrb[0].mxu0
    %v569 = vpop.f32.mrb[0].mxu0
    %v570 = vadd.f32 0.0, %v569
    %v571 = vpop.f32.mrb[0].mxu0
    %572 = vmatprep.mubr.bf16.mxu0 0
    %573 = vmatmul.mubr.bf16.gmra.mrb[0].mxu0 %v252
    %v574 = vpop.f32.mrb[0].mxu0
    %v575 = vadd.f32 0.0, %v574
    %v576 = vpop.f32.mrb[0].mxu0
    %v577 = vpop.f32.mrb[0].mxu0
    %v578 = vadd.f32 0.0, %v577
    %v579 = vpop.f32.mrb[0].mxu0
    %580 = vmatprep.mubr.bf16.mxu0 0
    %581 = vmatmul.mubr.bf16.gmra.mrb[0].mxu0 %v253
    %v582 = vpop.f32.mrb[0].mxu0
    %v583 = vadd.f32 0.0, %v582
    %v584 = vpop.f32.mrb[0].mxu0
    %v585 = vpop.f32.mrb[0].mxu0
    %v586 = vadd.f32 0.0, %v585
    %v587 = vpop.f32.mrb[0].mxu0
    %588 = vmatprep.mubr.bf16.mxu0 0
    %589 = vmatmul.mubr.bf16.gmra.mrb[0].mxu0 %v254
    %v590 = vpop.f32.mrb[0].mxu0
    %v591 = vadd.f32 0.0, %v590
    %v592 = vpop.f32.mrb[0].mxu0
    %v593 = vpop.f32.mrb[0].mxu0
    %v594 = vadd.f32 0.0, %v593
    %v595 = vpop.f32.mrb[0].mxu0
    %596 = vmatprep.mubr.bf16.mxu0 0
    %597 = vmatmul.mubr.bf16.gmra.mrb[0].mxu0 %v255
    %v598 = vpop.f32.mrb[0].mxu0
    %v599 = vadd.f32 0.0, %v598
    %v600 = vpop.f32.mrb[0].mxu0
    %v601 = vpop.f32.mrb[0].mxu0
    %v602 = vadd.f32 0.0, %v601
    %v603 = vpop.f32.mrb[0].mxu0
    %604 = vmatprep.mubr.bf16.mxu0 0
    %605 = vmatmul.mubr.bf16.gmra.mrb[0].mxu0 %v256
    %v606 = vpop.f32.mrb[0].mxu0
    %v607 = vadd.f32 0.0, %v606
    %v608 = vpop.f32.mrb[0].mxu0
    %v609 = vpop.f32.mrb[0].mxu0
    %v610 = vadd.f32 0.0, %v609
    %v611 = vpop.f32.mrb[0].mxu0
    %612 = vmatprep.mubr.bf16.mxu0 0
    %613 = vmatmul.mubr.bf16.gmra.mrb[0].mxu0 %v257
    %v614 = vpop.f32.mrb[0].mxu0
    %v615 = vadd.f32 0.0, %v614
    %v616 = vpop.f32.mrb[0].mxu0
    %v617 = vpop.f32.mrb[0].mxu0
    %v618 = vadd.f32 0.0, %v617
    %v619 = vpop.f32.mrb[0].mxu0
    %620 = vmatprep.mubr.bf16.mxu0 0
    %621 = vmatmul.mubr.bf16.gmra.mrb[0].mxu0 %v258
    %v622 = vpop.f32.mrb[0].mxu0
    %v623 = vadd.f32 0.0, %v622
    %v624 = vpop.f32.mrb[0].mxu0
    %v625 = vpop.f32.mrb[0].mxu0
    %v626 = vadd.f32 0.0, %v625
    %v627 = vpop.f32.mrb[0].mxu0
    %628 = vdwg.mxu0
    %v629 = vmul.f32 %v367, %v567
    %v630 = vmul.f32 %v372, %v570
    %v631 = vmul.f32 %v377, %v575
    %v632 = vmul.f32 %v382, %v578
    %v633 = vmul.f32 %v387, %v583
    %v634 = vmul.f32 %v392, %v586
    %v635 = vmul.f32 %v397, %v591
    %v636 = vmul.f32 %v402, %v594
    %v637 = vmul.f32 %v407, %v599
    %v638 = vmul.f32 %v412, %v602
    %v639 = vmul.f32 %v417, %v607
    %v640 = vmul.f32 %v422, %v610
    %v641 = vmul.f32 %v427, %v615
    %v642 = vmul.f32 %v432, %v618
    %v643 = vmul.f32 %v437, %v623
    %v644 = vmul.f32 %v442, %v626
    %v645 = vadd.f32 %v99, %v629
    %v646 = vadd.f32 %v100, %v630
    %v647 = vadd.f32 %v101, %v631
    %v648 = vadd.f32 %v102, %v632
    %v649 = vadd.f32 %v103, %v633
    %v650 = vadd.f32 %v104, %v634
    %v651 = vadd.f32 %v105, %v635
    %v652 = vadd.f32 %v106, %v636
    %v653 = vadd.f32 %v107, %v637
    %v654 = vadd.f32 %v108, %v638
    %v655 = vadd.f32 %v109, %v639
    %v656 = vadd.f32 %v110, %v640
    %v657 = vadd.f32 %v111, %v641
    %v658 = vadd.f32 %v112, %v642
    %v659 = vadd.f32 %v113, %v643
    %v660 = vadd.f32 %v114, %v644
    %v661 = vmax.f32 %v645, 0.0
    %v662 = vmax.f32 %v646, 0.0
    %v663 = vmax.f32 %v647, 0.0
    %v664 = vmax.f32 %v648, 0.0
    %v665 = vmax.f32 %v649, 0.0
    %v666 = vmax.f32 %v650, 0.0
    %v667 = vmax.f32 %v651, 0.0
    %v668 = vmax.f32 %v652, 0.0
    %v669 = vmax.f32 %v653, 0.0
    %v670 = vmax.f32 %v654, 0.0
    %v671 = vmax.f32 %v655, 0.0
    %v672 = vmax.f32 %v656, 0.0
    %v673 = vmax.f32 %v657, 0.0
    %v674 = vmax.f32 %v658, 0.0
    %v675 = vmax.f32 %v659, 0.0
    %v676 = vmax.f32 %v660, 0.0
    %v677 = vmin.f32 %v661, 1.0
    %v678 = vmin.f32 %v662, 1.0
    %v679 = vmin.f32 %v663, 1.0
    %v680 = vmin.f32 %v664, 1.0
    %v681 = vmin.f32 %v665, 1.0
    %v682 = vmin.f32 %v666, 1.0
    %v683 = vmin.f32 %v667, 1.0
    %v684 = vmin.f32 %v668, 1.0
    %v685 = vmin.f32 %v669, 1.0
    %v686 = vmin.f32 %v670, 1.0
    %v687 = vmin.f32 %v671, 1.0
    %v688 = vmin.f32 %v672, 1.0
    %v689 = vmin.f32 %v673, 1.0
    %v690 = vmin.f32 %v674, 1.0
    %v691 = vmin.f32 %v675, 1.0
    %v692 = vmin.f32 %v676, 1.0
    %v693 = vmul.f32 %v677, %v118
    %v694 = vmul.f32 %v678, %v123
    %v695 = vmul.f32 %v679, %v128
    %v696 = vmul.f32 %v680, %v133
    %v697 = vmul.f32 %v681, %v138
    %v698 = vmul.f32 %v682, %v143
    %v699 = vmul.f32 %v683, %v148
    %v700 = vmul.f32 %v684, %v153
    %v701 = vmul.f32 %v685, %v158
    %v702 = vmul.f32 %v686, %v163
    %v703 = vmul.f32 %v687, %v168
    %v704 = vmul.f32 %v688, %v173
    %v705 = vmul.f32 %v689, %v178
    %v706 = vmul.f32 %v690, %v183
    %v707 = vmul.f32 %v691, %v188
    %v708 = vmul.f32 %v692, %v193
    %v709 = vpack.c.bf16 %v694, %v693
    %v710 = vpack.c.bf16 %v696, %v695
    %v711 = vpack.c.bf16 %v698, %v697
    %v712 = vpack.c.bf16 %v700, %v699
    %v713 = vpack.c.bf16 %v702, %v701
    %v714 = vpack.c.bf16 %v704, %v703
    %v715 = vpack.c.bf16 %v706, %v705
    %v716 = vpack.c.bf16 %v708, %v707
    %717 = vmatprep.subr.bf16.mxu0 0
    %718 = vmatpush1.bf16.msra.mxu0 %v709
    %719 = vmatprep.subr.bf16.mxu0 0
    %720 = vmatpush1.bf16.msra.mxu0 %v710
    %721 = vmatprep.subr.bf16.mxu0 0
    %722 = vmatpush1.bf16.msra.mxu0 %v711
    %723 = vmatprep.subr.bf16.mxu0 0
    %724 = vmatpush1.bf16.msra.mxu0 %v712
    %725 = vmatprep.subr.bf16.mxu0 0
    %726 = vmatpush1.bf16.msra.mxu0 %v713
    %727 = vmatprep.subr.bf16.mxu0 0
    %728 = vmatpush1.bf16.msra.mxu0 %v714
    %729 = vmatprep.subr.bf16.mxu0 0
    %730 = vmatpush1.bf16.msra.mxu0 %v715
    %731 = vmatprep.subr.bf16.mxu0 0
    %732 = vmatpush1.bf16.msra.mxu0 %v716
    %733 = vmatprep.subr.bf16.mxu0 0
    %734 = vmatpush1.bf16.msra.mxu0 0
    %735 = vmatprep.subr.bf16.mxu0 0
    %736 = vmatpush1.bf16.msra.mxu0 0
    %737 = vmatprep.subr.bf16.mxu0 0
    %738 = vmatpush1.bf16.msra.mxu0 0
    %739 = vmatprep.subr.bf16.mxu0 0
    %740 = vmatpush1.bf16.msra.mxu0 0
    %741 = vmatprep.subr.bf16.mxu0 0
    %742 = vmatpush1.bf16.msra.mxu0 0
    %743 = vmatprep.subr.bf16.mxu0 0
    %744 = vmatpush1.bf16.msra.mxu0 0
    %745 = vmatprep.subr.bf16.mxu0 0
    %746 = vmatpush1.bf16.msra.mxu0 0
    %747 = vmatprep.subr.bf16.mxu0 0
    %748 = vmatpush1.bf16.msra.mxu0 0
    %749 = vmatprep.mubr.bf16.mxu0 0
    %750 = vmatmul.mubr.bf16.gmra.mrb[0].mxu0 %v251
    %v751 = vpop.f32.mrb[0].mxu0
    %v752 = vadd.f32 0.0, %v751
    %v753 = vpop.f32.mrb[0].mxu0
    %v754 = vpop.f32.mrb[0].mxu0
    %v755 = vadd.f32 0.0, %v754
    %v756 = vpop.f32.mrb[0].mxu0
    %757 = vmatprep.mubr.bf16.mxu0 0
    %758 = vmatmul.mubr.bf16.gmra.mrb[0].mxu0 %v252
    %v759 = vpop.f32.mrb[0].mxu0
    %v760 = vadd.f32 0.0, %v759
    %v761 = vpop.f32.mrb[0].mxu0
    %v762 = vpop.f32.mrb[0].mxu0
    %v763 = vadd.f32 0.0, %v762
    %v764 = vpop.f32.mrb[0].mxu0
    %765 = vmatprep.mubr.bf16.mxu0 0
    %766 = vmatmul.mubr.bf16.gmra.mrb[0].mxu0 %v253
    %v767 = vpop.f32.mrb[0].mxu0
    %v768 = vadd.f32 0.0, %v767
    %v769 = vpop.f32.mrb[0].mxu0
    %v770 = vpop.f32.mrb[0].mxu0
    %v771 = vadd.f32 0.0, %v770
    %v772 = vpop.f32.mrb[0].mxu0
    %773 = vmatprep.mubr.bf16.mxu0 0
    %774 = vmatmul.mubr.bf16.gmra.mrb[0].mxu0 %v254
    %v775 = vpop.f32.mrb[0].mxu0
    %v776 = vadd.f32 0.0, %v775
    %v777 = vpop.f32.mrb[0].mxu0
    %v778 = vpop.f32.mrb[0].mxu0
    %v779 = vadd.f32 0.0, %v778
    %v780 = vpop.f32.mrb[0].mxu0
    %781 = vmatprep.mubr.bf16.mxu0 0
    %782 = vmatmul.mubr.bf16.gmra.mrb[0].mxu0 %v255
    %v783 = vpop.f32.mrb[0].mxu0
    %v784 = vadd.f32 0.0, %v783
    %v785 = vpop.f32.mrb[0].mxu0
    %v786 = vpop.f32.mrb[0].mxu0
    %v787 = vadd.f32 0.0, %v786
    %v788 = vpop.f32.mrb[0].mxu0
    %789 = vmatprep.mubr.bf16.mxu0 0
    %790 = vmatmul.mubr.bf16.gmra.mrb[0].mxu0 %v256
    %v791 = vpop.f32.mrb[0].mxu0
    %v792 = vadd.f32 0.0, %v791
    %v793 = vpop.f32.mrb[0].mxu0
    %v794 = vpop.f32.mrb[0].mxu0
    %v795 = vadd.f32 0.0, %v794
    %v796 = vpop.f32.mrb[0].mxu0
    %797 = vmatprep.mubr.bf16.mxu0 0
    %798 = vmatmul.mubr.bf16.gmra.mrb[0].mxu0 %v257
    %v799 = vpop.f32.mrb[0].mxu0
    %v800 = vadd.f32 0.0, %v799
    %v801 = vpop.f32.mrb[0].mxu0
    %v802 = vpop.f32.mrb[0].mxu0
    %v803 = vadd.f32 0.0, %v802
    %v804 = vpop.f32.mrb[0].mxu0
    %805 = vmatprep.mubr.bf16.mxu0 0
    %806 = vmatmul.mubr.bf16.gmra.mrb[0].mxu0 %v258
    %v807 = vpop.f32.mrb[0].mxu0
    %v808 = vadd.f32 0.0, %v807
    %v809 = vpop.f32.mrb[0].mxu0
    %v810 = vpop.f32.mrb[0].mxu0
    %v811 = vadd.f32 0.0, %v810
    %v812 = vpop.f32.mrb[0].mxu0
    %813 = vdwg.mxu0
    %v814 = vmul.f32 %v367, %v752
    %v815 = vmul.f32 %v372, %v755
    %v816 = vmul.f32 %v377, %v760
    %v817 = vmul.f32 %v382, %v763
    %v818 = vmul.f32 %v387, %v768
    %v819 = vmul.f32 %v392, %v771
    %v820 = vmul.f32 %v397, %v776
    %v821 = vmul.f32 %v402, %v779
    %v822 = vmul.f32 %v407, %v784
    %v823 = vmul.f32 %v412, %v787
    %v824 = vmul.f32 %v417, %v792
    %v825 = vmul.f32 %v422, %v795
    %v826 = vmul.f32 %v427, %v800
    %v827 = vmul.f32 %v432, %v803
    %v828 = vmul.f32 %v437, %v808
    %v829 = vmul.f32 %v442, %v811
    %v830 = vadd.f32 %v99, %v814
    %v831 = vadd.f32 %v100, %v815
    %v832 = vadd.f32 %v101, %v816
    %v833 = vadd.f32 %v102, %v817
    %v834 = vadd.f32 %v103, %v818
    %v835 = vadd.f32 %v104, %v819
    %v836 = vadd.f32 %v105, %v820
    %v837 = vadd.f32 %v106, %v821
    %v838 = vadd.f32 %v107, %v822
    %v839 = vadd.f32 %v108, %v823
    %v840 = vadd.f32 %v109, %v824
    %v841 = vadd.f32 %v110, %v825
    %v842 = vadd.f32 %v111, %v826
    %v843 = vadd.f32 %v112, %v827
    %v844 = vadd.f32 %v113, %v828
    %v845 = vadd.f32 %v114, %v829
    %v846 = vmax.f32 %v830, 0.0
    %v847 = vmax.f32 %v831, 0.0
    %v848 = vmax.f32 %v832, 0.0
    %v849 = vmax.f32 %v833, 0.0
    %v850 = vmax.f32 %v834, 0.0
    %v851 = vmax.f32 %v835, 0.0
    %v852 = vmax.f32 %v836, 0.0
    %v853 = vmax.f32 %v837, 0.0
    %v854 = vmax.f32 %v838, 0.0
    %v855 = vmax.f32 %v839, 0.0
    %v856 = vmax.f32 %v840, 0.0
    %v857 = vmax.f32 %v841, 0.0
    %v858 = vmax.f32 %v842, 0.0
    %v859 = vmax.f32 %v843, 0.0
    %v860 = vmax.f32 %v844, 0.0
    %v861 = vmax.f32 %v845, 0.0
    %v862 = vmin.f32 %v846, 1.0
    %v863 = vmin.f32 %v847, 1.0
    %v864 = vmin.f32 %v848, 1.0
    %v865 = vmin.f32 %v849, 1.0
    %v866 = vmin.f32 %v850, 1.0
    %v867 = vmin.f32 %v851, 1.0
    %v868 = vmin.f32 %v852, 1.0
    %v869 = vmin.f32 %v853, 1.0
    %v870 = vmin.f32 %v854, 1.0
    %v871 = vmin.f32 %v855, 1.0
    %v872 = vmin.f32 %v856, 1.0
    %v873 = vmin.f32 %v857, 1.0
    %v874 = vmin.f32 %v858, 1.0
    %v875 = vmin.f32 %v859, 1.0
    %v876 = vmin.f32 %v860, 1.0
    %v877 = vmin.f32 %v861, 1.0
    %v878 = vmul.f32 %v862, %v118
    %v879 = vmul.f32 %v863, %v123
    %v880 = vmul.f32 %v864, %v128
    %v881 = vmul.f32 %v865, %v133
    %v882 = vmul.f32 %v866, %v138
    %v883 = vmul.f32 %v867, %v143
    %v884 = vmul.f32 %v868, %v148
    %v885 = vmul.f32 %v869, %v153
    %v886 = vmul.f32 %v870, %v158
    %v887 = vmul.f32 %v871, %v163
    %v888 = vmul.f32 %v872, %v168
    %v889 = vmul.f32 %v873, %v173
    %v890 = vmul.f32 %v874, %v178
    %v891 = vmul.f32 %v875, %v183
    %v892 = vmul.f32 %v876, %v188
    %v893 = vmul.f32 %v877, %v193
    %v894 = vpack.c.bf16 %v879, %v878
    %v895 = vpack.c.bf16 %v881, %v880
    %v896 = vpack.c.bf16 %v883, %v882
    %v897 = vpack.c.bf16 %v885, %v884
    %v898 = vpack.c.bf16 %v887, %v886
    %v899 = vpack.c.bf16 %v889, %v888
    %v900 = vpack.c.bf16 %v891, %v890
    %v901 = vpack.c.bf16 %v893, %v892
    %902 = vmatprep.subr.bf16.mxu0 0
    %903 = vmatpush1.bf16.msra.mxu0 %v894
    %904 = vmatprep.subr.bf16.mxu0 0
    %905 = vmatpush1.bf16.msra.mxu0 %v895
    %906 = vmatprep.subr.bf16.mxu0 0
    %907 = vmatpush1.bf16.msra.mxu0 %v896
    %908 = vmatprep.subr.bf16.mxu0 0
    %909 = vmatpush1.bf16.msra.mxu0 %v897
    %910 = vmatprep.subr.bf16.mxu0 0
    %911 = vmatpush1.bf16.msra.mxu0 %v898
    %912 = vmatprep.subr.bf16.mxu0 0
    %913 = vmatpush1.bf16.msra.mxu0 %v899
    %914 = vmatprep.subr.bf16.mxu0 0
    %915 = vmatpush1.bf16.msra.mxu0 %v900
    %916 = vmatprep.subr.bf16.mxu0 0
    %917 = vmatpush1.bf16.msra.mxu0 %v901
    %918 = vmatprep.subr.bf16.mxu0 0
    %919 = vmatpush1.bf16.msra.mxu0 0
    %920 = vmatprep.subr.bf16.mxu0 0
    %921 = vmatpush1.bf16.msra.mxu0 0
    %922 = vmatprep.subr.bf16.mxu0 0
    %923 = vmatpush1.bf16.msra.mxu0 0
    %924 = vmatprep.subr.bf16.mxu0 0
    %925 = vmatpush1.bf16.msra.mxu0 0
    %926 = vmatprep.subr.bf16.mxu0 0
    %927 = vmatpush1.bf16.msra.mxu0 0
    %928 = vmatprep.subr.bf16.mxu0 0
    %929 = vmatpush1.bf16.msra.mxu0 0
    %930 = vmatprep.subr.bf16.mxu0 0
    %931 = vmatpush1.bf16.msra.mxu0 0
    %932 = vmatprep.subr.bf16.mxu0 0
    %933 = vmatpush1.bf16.msra.mxu0 0
    %934 = vmatprep.mubr.bf16.mxu0 0
    %935 = vmatmul.mubr.bf16.gmra.mrb[0].mxu0 %v251
    %v936 = vpop.f32.mrb[0].mxu0
    %v937 = vadd.f32 0.0, %v936
    %v938 = vpop.f32.mrb[0].mxu0
    %v939 = vpop.f32.mrb[0].mxu0
    %v940 = vadd.f32 0.0, %v939
    %v941 = vpop.f32.mrb[0].mxu0
    %942 = vmatprep.mubr.bf16.mxu0 0
    %943 = vmatmul.mubr.bf16.gmra.mrb[0].mxu0 %v252
    %v944 = vpop.f32.mrb[0].mxu0
    %v945 = vadd.f32 0.0, %v944
    %v946 = vpop.f32.mrb[0].mxu0
    %v947 = vpop.f32.mrb[0].mxu0
    %v948 = vadd.f32 0.0, %v947
    %v949 = vpop.f32.mrb[0].mxu0
    %950 = vmatprep.mubr.bf16.mxu0 0
    %951 = vmatmul.mubr.bf16.gmra.mrb[0].mxu0 %v253
    %v952 = vpop.f32.mrb[0].mxu0
    %v953 = vadd.f32 0.0, %v952
    %v954 = vpop.f32.mrb[0].mxu0
    %v955 = vpop.f32.mrb[0].mxu0
    %v956 = vadd.f32 0.0, %v955
    %v957 = vpop.f32.mrb[0].mxu0
    %958 = vmatprep.mubr.bf16.mxu0 0
    %959 = vmatmul.mubr.bf16.gmra.mrb[0].mxu0 %v254
    %v960 = vpop.f32.mrb[0].mxu0
    %v961 = vadd.f32 0.0, %v960
    %v962 = vpop.f32.mrb[0].mxu0
    %v963 = vpop.f32.mrb[0].mxu0
    %v964 = vadd.f32 0.0, %v963
    %v965 = vpop.f32.mrb[0].mxu0
    %966 = vmatprep.mubr.bf16.mxu0 0
    %967 = vmatmul.mubr.bf16.gmra.mrb[0].mxu0 %v255
    %v968 = vpop.f32.mrb[0].mxu0
    %v969 = vadd.f32 0.0, %v968
    %v970 = vpop.f32.mrb[0].mxu0
    %v971 = vpop.f32.mrb[0].mxu0
    %v972 = vadd.f32 0.0, %v971
    %v973 = vpop.f32.mrb[0].mxu0
    %974 = vmatprep.mubr.bf16.mxu0 0
    %975 = vmatmul.mubr.bf16.gmra.mrb[0].mxu0 %v256
    %v976 = vpop.f32.mrb[0].mxu0
    %v977 = vadd.f32 0.0, %v976
    %v978 = vpop.f32.mrb[0].mxu0
    %v979 = vpop.f32.mrb[0].mxu0
    %v980 = vadd.f32 0.0, %v979
    %v981 = vpop.f32.mrb[0].mxu0
    %982 = vmatprep.mubr.bf16.mxu0 0
    %983 = vmatmul.mubr.bf16.gmra.mrb[0].mxu0 %v257
    %v984 = vpop.f32.mrb[0].mxu0
    %v985 = vadd.f32 0.0, %v984
    %v986 = vpop.f32.mrb[0].mxu0
    %v987 = vpop.f32.mrb[0].mxu0
    %v988 = vadd.f32 0.0, %v987
    %v989 = vpop.f32.mrb[0].mxu0
    %990 = vmatprep.mubr.bf16.mxu0 0
    %991 = vmatmul.mubr.bf16.gmra.mrb[0].mxu0 %v258
    %v992 = vpop.f32.mrb[0].mxu0
    %v993 = vadd.f32 0.0, %v992
    %v994 = vpop.f32.mrb[0].mxu0
    %v995 = vpop.f32.mrb[0].mxu0
    %v996 = vadd.f32 0.0, %v995
    %v997 = vpop.f32.mrb[0].mxu0
    %998 = vdwg.mxu0
    %v999 = vmul.f32 %v367, %v937
    %v1000 = vmul.f32 %v372, %v940
    %v1001 = vmul.f32 %v377, %v945
    %v1002 = vmul.f32 %v382, %v948
    %v1003 = vmul.f32 %v387, %v953
    %v1004 = vmul.f32 %v392, %v956
    %v1005 = vmul.f32 %v397, %v961
    %v1006 = vmul.f32 %v402, %v964
    %v1007 = vmul.f32 %v407, %v969
    %v1008 = vmul.f32 %v412, %v972
    %v1009 = vmul.f32 %v417, %v977
    %v1010 = vmul.f32 %v422, %v980
    %v1011 = vmul.f32 %v427, %v985
    %v1012 = vmul.f32 %v432, %v988
    %v1013 = vmul.f32 %v437, %v993
    %v1014 = vmul.f32 %v442, %v996
    %v1015 = vadd.f32 %v99, %v999
    %v1016 = vadd.f32 %v100, %v1000
    %v1017 = vadd.f32 %v101, %v1001
    %v1018 = vadd.f32 %v102, %v1002
    %v1019 = vadd.f32 %v103, %v1003
    %v1020 = vadd.f32 %v104, %v1004
    %v1021 = vadd.f32 %v105, %v1005
    %v1022 = vadd.f32 %v106, %v1006
    %v1023 = vadd.f32 %v107, %v1007
    %v1024 = vadd.f32 %v108, %v1008
    %v1025 = vadd.f32 %v109, %v1009
    %v1026 = vadd.f32 %v110, %v1010
    %v1027 = vadd.f32 %v111, %v1011
    %v1028 = vadd.f32 %v112, %v1012
    %v1029 = vadd.f32 %v113, %v1013
    %v1030 = vadd.f32 %v114, %v1014
    %v1031 = vmax.f32 %v1015, 0.0
    %v1032 = vmax.f32 %v1016, 0.0
    %v1033 = vmax.f32 %v1017, 0.0
    %v1034 = vmax.f32 %v1018, 0.0
    %v1035 = vmax.f32 %v1019, 0.0
    %v1036 = vmax.f32 %v1020, 0.0
    %v1037 = vmax.f32 %v1021, 0.0
    %v1038 = vmax.f32 %v1022, 0.0
    %v1039 = vmax.f32 %v1023, 0.0
    %v1040 = vmax.f32 %v1024, 0.0
    %v1041 = vmax.f32 %v1025, 0.0
    %v1042 = vmax.f32 %v1026, 0.0
    %v1043 = vmax.f32 %v1027, 0.0
    %v1044 = vmax.f32 %v1028, 0.0
    %v1045 = vmax.f32 %v1029, 0.0
    %v1046 = vmax.f32 %v1030, 0.0
    %v1047 = vmin.f32 %v1031, 1.0
    %v1048 = vmin.f32 %v1032, 1.0
    %v1049 = vmin.f32 %v1033, 1.0
    %v1050 = vmin.f32 %v1034, 1.0
    %v1051 = vmin.f32 %v1035, 1.0
    %v1052 = vmin.f32 %v1036, 1.0
    %v1053 = vmin.f32 %v1037, 1.0
    %v1054 = vmin.f32 %v1038, 1.0
    %v1055 = vmin.f32 %v1039, 1.0
    %v1056 = vmin.f32 %v1040, 1.0
    %v1057 = vmin.f32 %v1041, 1.0
    %v1058 = vmin.f32 %v1042, 1.0
    %v1059 = vmin.f32 %v1043, 1.0
    %v1060 = vmin.f32 %v1044, 1.0
    %v1061 = vmin.f32 %v1045, 1.0
    %v1062 = vmin.f32 %v1046, 1.0
    %v1063 = vmul.f32 %v1047, %v118
    %v1064 = vmul.f32 %v1048, %v123
    %v1065 = vmul.f32 %v1049, %v128
    %v1066 = vmul.f32 %v1050, %v133
    %v1067 = vmul.f32 %v1051, %v138
    %v1068 = vmul.f32 %v1052, %v143
    %v1069 = vmul.f32 %v1053, %v148
    %v1070 = vmul.f32 %v1054, %v153
    %v1071 = vmul.f32 %v1055, %v158
    %v1072 = vmul.f32 %v1056, %v163
    %v1073 = vmul.f32 %v1057, %v168
    %v1074 = vmul.f32 %v1058, %v173
    %v1075 = vmul.f32 %v1059, %v178
    %v1076 = vmul.f32 %v1060, %v183
    %v1077 = vmul.f32 %v1061, %v188
    %v1078 = vmul.f32 %v1062, %v193
    %v1079 = vpack.c.bf16 %v1064, %v1063
    %v1080 = vpack.c.bf16 %v1066, %v1065
    %v1081 = vpack.c.bf16 %v1068, %v1067
    %v1082 = vpack.c.bf16 %v1070, %v1069
    %v1083 = vpack.c.bf16 %v1072, %v1071
    %v1084 = vpack.c.bf16 %v1074, %v1073
    %v1085 = vpack.c.bf16 %v1076, %v1075
    %v1086 = vpack.c.bf16 %v1078, %v1077
    %1087 = vmatprep.subr.bf16.mxu0 0
    %1088 = vmatpush1.bf16.msra.mxu0 %v1079
    %1089 = vmatprep.subr.bf16.mxu0 0
    %1090 = vmatpush1.bf16.msra.mxu0 %v1080
    %1091 = vmatprep.subr.bf16.mxu0 0
    %1092 = vmatpush1.bf16.msra.mxu0 %v1081
    %1093 = vmatprep.subr.bf16.mxu0 0
    %1094 = vmatpush1.bf16.msra.mxu0 %v1082
    %1095 = vmatprep.subr.bf16.mxu0 0
    %1096 = vmatpush1.bf16.msra.mxu0 %v1083
    %1097 = vmatprep.subr.bf16.mxu0 0
    %1098 = vmatpush1.bf16.msra.mxu0 %v1084
    %1099 = vmatprep.subr.bf16.mxu0 0
    %1100 = vmatpush1.bf16.msra.mxu0 %v1085
    %1101 = vmatprep.subr.bf16.mxu0 0
    %1102 = vmatpush1.bf16.msra.mxu0 %v1086
    %1103 = vmatprep.subr.bf16.mxu0 0
    %1104 = vmatpush1.bf16.msra.mxu0 0
    %1105 = vmatprep.subr.bf16.mxu0 0
    %1106 = vmatpush1.bf16.msra.mxu0 0
    %1107 = vmatprep.subr.bf16.mxu0 0
    %1108 = vmatpush1.bf16.msra.mxu0 0
    %1109 = vmatprep.subr.bf16.mxu0 0
    %1110 = vmatpush1.bf16.msra.mxu0 0
    %1111 = vmatprep.subr.bf16.mxu0 0
    %1112 = vmatpush1.bf16.msra.mxu0 0
    %1113 = vmatprep.subr.bf16.mxu0 0
    %1114 = vmatpush1.bf16.msra.mxu0 0
    %1115 = vmatprep.subr.bf16.mxu0 0
    %1116 = vmatpush1.bf16.msra.mxu0 0
    %1117 = vmatprep.subr.bf16.mxu0 0
    %1118 = vmatpush1.bf16.msra.mxu0 0
    %1119 = vmatprep.mubr.bf16.mxu0 0
    %1120 = vmatmul.mubr.bf16.gmra.mrb[0].mxu0 %v251
    %v1121 = vpop.f32.mrb[0].mxu0
    %v1122 = vadd.f32 0.0, %v1121
    %v1123 = vpop.f32.mrb[0].mxu0
    %v1124 = vpop.f32.mrb[0].mxu0
    %v1125 = vadd.f32 0.0, %v1124
    %v1126 = vpop.f32.mrb[0].mxu0
    %1127 = vmatprep.mubr.bf16.mxu0 0
    %1128 = vmatmul.mubr.bf16.gmra.mrb[0].mxu0 %v252
    %v1129 = vpop.f32.mrb[0].mxu0
    %v1130 = vadd.f32 0.0, %v1129
    %v1131 = vpop.f32.mrb[0].mxu0
    %v1132 = vpop.f32.mrb[0].mxu0
    %v1133 = vadd.f32 0.0, %v1132
    %v1134 = vpop.f32.mrb[0].mxu0
    %1135 = vmatprep.mubr.bf16.mxu0 0
    %1136 = vmatmul.mubr.bf16.gmra.mrb[0].mxu0 %v253
    %v1137 = vpop.f32.mrb[0].mxu0
    %v1138 = vadd.f32 0.0, %v1137
    %v1139 = vpop.f32.mrb[0].mxu0
    %v1140 = vpop.f32.mrb[0].mxu0
    %v1141 = vadd.f32 0.0, %v1140
    %v1142 = vpop.f32.mrb[0].mxu0
    %1143 = vmatprep.mubr.bf16.mxu0 0
    %1144 = vmatmul.mubr.bf16.gmra.mrb[0].mxu0 %v254
    %v1145 = vpop.f32.mrb[0].mxu0
    %v1146 = vadd.f32 0.0, %v1145
    %v1147 = vpop.f32.mrb[0].mxu0
    %v1148 = vpop.f32.mrb[0].mxu0
    %v1149 = vadd.f32 0.0, %v1148
    %v1150 = vpop.f32.mrb[0].mxu0
    %1151 = vmatprep.mubr.bf16.mxu0 0
    %1152 = vmatmul.mubr.bf16.gmra.mrb[0].mxu0 %v255
    %v1153 = vpop.f32.mrb[0].mxu0
    %v1154 = vadd.f32 0.0, %v1153
    %v1155 = vpop.f32.mrb[0].mxu0
    %v1156 = vpop.f32.mrb[0].mxu0
    %v1157 = vadd.f32 0.0, %v1156
    %v1158 = vpop.f32.mrb[0].mxu0
    %1159 = vmatprep.mubr.bf16.mxu0 0
    %1160 = vmatmul.mubr.bf16.gmra.mrb[0].mxu0 %v256
    %v1161 = vpop.f32.mrb[0].mxu0
    %v1162 = vadd.f32 0.0, %v1161
    %v1163 = vpop.f32.mrb[0].mxu0
    %v1164 = vpop.f32.mrb[0].mxu0
    %v1165 = vadd.f32 0.0, %v1164
    %v1166 = vpop.f32.mrb[0].mxu0
    %1167 = vmatprep.mubr.bf16.mxu0 0
    %1168 = vmatmul.mubr.bf16.gmra.mrb[0].mxu0 %v257
    %v1169 = vpop.f32.mrb[0].mxu0
    %v1170 = vadd.f32 0.0, %v1169
    %v1171 = vpop.f32.mrb[0].mxu0
    %v1172 = vpop.f32.mrb[0].mxu0
    %v1173 = vadd.f32 0.0, %v1172
    %v1174 = vpop.f32.mrb[0].mxu0
    %1175 = vmatprep.mubr.bf16.mxu0 0
    %1176 = vmatmul.mubr.bf16.gmra.mrb[0].mxu0 %v258
    %v1177 = vpop.f32.mrb[0].mxu0
    %v1178 = vadd.f32 0.0, %v1177
    %v1179 = vpop.f32.mrb[0].mxu0
    %v1180 = vpop.f32.mrb[0].mxu0
    %v1181 = vadd.f32 0.0, %v1180
    %v1182 = vpop.f32.mrb[0].mxu0
    %1183 = vdwg.mxu0
    %v1184 = vmul.f32 %v367, %v1122
    %v1185 = vmul.f32 %v372, %v1125
    %v1186 = vmul.f32 %v377, %v1130
    %v1187 = vmul.f32 %v382, %v1133
    %v1188 = vmul.f32 %v387, %v1138
    %v1189 = vmul.f32 %v392, %v1141
    %v1190 = vmul.f32 %v397, %v1146
    %v1191 = vmul.f32 %v402, %v1149
    %v1192 = vmul.f32 %v407, %v1154
    %v1193 = vmul.f32 %v412, %v1157
    %v1194 = vmul.f32 %v417, %v1162
    %v1195 = vmul.f32 %v422, %v1165
    %v1196 = vmul.f32 %v427, %v1170
    %v1197 = vmul.f32 %v432, %v1173
    %v1198 = vmul.f32 %v437, %v1178
    %v1199 = vmul.f32 %v442, %v1181
    %v1200 = vadd.f32 %v99, %v1184
    %v1201 = vadd.f32 %v100, %v1185
    %v1202 = vadd.f32 %v101, %v1186
    %v1203 = vadd.f32 %v102, %v1187
    %v1204 = vadd.f32 %v103, %v1188
    %v1205 = vadd.f32 %v104, %v1189
    %v1206 = vadd.f32 %v105, %v1190
    %v1207 = vadd.f32 %v106, %v1191
    %v1208 = vadd.f32 %v107, %v1192
    %v1209 = vadd.f32 %v108, %v1193
    %v1210 = vadd.f32 %v109, %v1194
    %v1211 = vadd.f32 %v110, %v1195
    %v1212 = vadd.f32 %v111, %v1196
    %v1213 = vadd.f32 %v112, %v1197
    %v1214 = vadd.f32 %v113, %v1198
    %v1215 = vadd.f32 %v114, %v1199
    %v1216 = vmax.f32 %v1200, 0.0
    %v1217 = vmax.f32 %v1201, 0.0
    %v1218 = vmax.f32 %v1202, 0.0
    %v1219 = vmax.f32 %v1203, 0.0
    %v1220 = vmax.f32 %v1204, 0.0
    %v1221 = vmax.f32 %v1205, 0.0
    %v1222 = vmax.f32 %v1206, 0.0
    %v1223 = vmax.f32 %v1207, 0.0
    %v1224 = vmax.f32 %v1208, 0.0
    %v1225 = vmax.f32 %v1209, 0.0
    %v1226 = vmax.f32 %v1210, 0.0
    %v1227 = vmax.f32 %v1211, 0.0
    %v1228 = vmax.f32 %v1212, 0.0
    %v1229 = vmax.f32 %v1213, 0.0
    %v1230 = vmax.f32 %v1214, 0.0
    %v1231 = vmax.f32 %v1215, 0.0
    %v1232 = vmin.f32 %v1216, 1.0
    %v1233 = vmin.f32 %v1217, 1.0
    %v1234 = vmin.f32 %v1218, 1.0
    %v1235 = vmin.f32 %v1219, 1.0
    %v1236 = vmin.f32 %v1220, 1.0
    %v1237 = vmin.f32 %v1221, 1.0
    %v1238 = vmin.f32 %v1222, 1.0
    %v1239 = vmin.f32 %v1223, 1.0
    %v1240 = vmin.f32 %v1224, 1.0
    %v1241 = vmin.f32 %v1225, 1.0
    %v1242 = vmin.f32 %v1226, 1.0
    %v1243 = vmin.f32 %v1227, 1.0
    %v1244 = vmin.f32 %v1228, 1.0
    %v1245 = vmin.f32 %v1229, 1.0
    %v1246 = vmin.f32 %v1230, 1.0
    %v1247 = vmin.f32 %v1231, 1.0
    %1248 = vst [vmem:[#allocation2] sm:$0xff] %v1232
    %1249 = vst [vmem:[#allocation2 + $0x8] sm:$0xff] %v1233
    %1250 = vst [vmem:[#allocation2 + $0x10] sm:$0xff] %v1234
    %1251 = vst [vmem:[#allocation2 + $0x18] sm:$0xff] %v1235
    %1252 = vst [vmem:[#allocation2 + $0x20] sm:$0xff] %v1236
    %1253 = vst [vmem:[#allocation2 + $0x28] sm:$0xff] %v1237
    %1254 = vst [vmem:[#allocation2 + $0x30] sm:$0xff] %v1238
    %1255 = vst [vmem:[#allocation2 + $0x38] sm:$0xff] %v1239
    %1256 = vst [vmem:[#allocation2 + $0x40] sm:$0xff] %v1240
    %1257 = vst [vmem:[#allocation2 + $0x48] sm:$0xff] %v1241
    %1258 = vst [vmem:[#allocation2 + $0x50] sm:$0xff] %v1242
    %1259 = vst [vmem:[#allocation2 + $0x58] sm:$0xff] %v1243
    %1260 = vst [vmem:[#allocation2 + $0x60] sm:$0xff] %v1244
    %1261 = vst [vmem:[#allocation2 + $0x68] sm:$0xff] %v1245
    %1262 = vst [vmem:[#allocation2 + $0x70] sm:$0xff] %v1246
    %1263 = vst [vmem:[#allocation2 + $0x78] sm:$0xff] %v1247
    // Predicated region
    $region18: #{tpu_custom_call.1} parent=1 // pred_check
      _
    $region19: #{tpu_custom_call.1} parent=1 // pred_check_branch
      %1265 = sbr.rel (0) target = $region21
    $region20: #{tpu_custom_call.1} parent=1 // pred_region
      %s1267 = ssub.s32 2048, 2048
      %1268 = vsyncadd [#allocation3], %s1267
      %s1269 = sshll.u32 [#allocation2], 4
      %s1270 = int_to_ptr.vmem [resolvable:$true] %s1269
      %1275 = dma.vmem_to_hbm [thread:$0]  %s1270, 2048, %s4, [#allocation3], 128, 128, 8
    $region21: #{tpu_custom_call.1} parent=1 // pred_fallthru
      _
    // Predicated region
    $region22: #{tpu_custom_call.1} parent=1 // pred_check
      _
    $region23: #{tpu_custom_call.1} parent=1 // pred_check_branch
      %1277 = sbr.rel (0) target = $region25
    $region24: #{tpu_custom_call.1} parent=1 // pred_region
      %1278 = dma.done [#allocation3], 2048
    $region25: #{tpu_custom_call.1} parent=1 // pred_fallthru
      _
    %1279 = vsyncpa [#allocation3], 1

</llo_original>
